<compile_context>
chip_gen: v7x
topology: tpu7x:2x2x1
jax: 0.10.0
libtpu: 0.0.40
codegen_flags: <defaults>
</compile_context>

<pallas_src>
import math

import jax
import jax.numpy as jnp
from jax.experimental import pallas as pl
from jax.experimental.pallas import tpu as pltpu


# --------------------------------------------------------------------------------------
# PE table (matches the PyTorch buffer: pe[:, 0::2] = sin, pe[:, 1::2] = cos)
# --------------------------------------------------------------------------------------
def _build_pe_table(d_model: int, max_len: int = 1000) -> jnp.ndarray:
    position = jnp.arange(max_len, dtype=jnp.float32)[:, None]                       # (max_len, 1)
    div_term = jnp.exp(
        jnp.arange(0, d_model, 2, dtype=jnp.float32) * (-math.log(10000.0) / d_model)
    )                                                                                # (d_model//2,)
    ang = position * div_term                                                        # (max_len, d//2)
    pe = jnp.stack([jnp.sin(ang), jnp.cos(ang)], axis=-1).reshape(max_len, d_model)  # interleave
    return pe.astype(jnp.float32)


# --------------------------------------------------------------------------------------
# Kernel: same-shape VALU add on lane-dense (1, TR, 128) tiles
# --------------------------------------------------------------------------------------
def _add_pe_kernel(x_ref, pe_ref, o_ref):
    o_ref[...] = (x_ref[...] + pe_ref[...]).astype(o_ref.dtype)


# --------------------------------------------------------------------------------------
# Tiling helpers
# --------------------------------------------------------------------------------------
def _pick_row_tile(total_rows: int, target_rows: int) -> int:
    """Row-tile size: full extent if small, else a multiple of 8; prefer an exact divisor of R."""
    if total_rows <= target_rows:
        return total_rows                              # equals the array dim -> legal block dim
    target = max(8, (target_rows // 8) * 8)
    tr = target
    lo = max(8, target // 2)
    while tr >= lo:                                    # prefer no padded final tile
        if total_rows % tr == 0:
            return tr
        tr -= 8
    return target                                      # padded last tile is still correct


def _config_tiers():
    """Launch configs from most to least aggressive; later tiers are guaranteed-safe fallbacks."""
    tiers = []
    core_parallel = getattr(pltpu, "CORE_PARALLEL", None)
    parallel = getattr(pltpu, "PARALLEL", "parallel")
    arbitrary = getattr(pltpu, "ARBITRARY", "arbitrary")
    pe_buf = 1 if hasattr(pl, "Buffered") else None
    if core_parallel is not None:
        # v7x: shard the row-tile axis across the 2 TensorCores (batch stays inner for pe reuse).
        tiers.append(((core_parallel, arbitrary), pe_buf))
    tiers.append(((parallel, arbitrary), pe_buf))
    tiers.append((("parallel", "arbitrary"), None))    # maximally conservative
    return tiers


def _launch(x3, pe3, TR, grid, out_dtype, semantics, pe_buffers):
    B, R, _ = x3.shape
    pe_kwargs = {}
    if pe_buffers is not None:
        # pe block index is constant across the inner (batch) axis -> second buffer is dead weight.
        pe_kwargs["pipeline_mode"] = pl.Buffered(pe_buffers)
    return pl.pallas_call(
        _add_pe_kernel,
        out_shape=jax.ShapeDtypeStruct((B, R, 128), out_dtype),
        grid_spec=pltpu.PrefetchScalarGridSpec(
            num_scalar_prefetch=0,
            grid=grid,                                         # (row_tiles, B): batch innermost
            in_specs=[
                pl.BlockSpec((1, TR, 128), lambda r, b: (b, r, 0)),              # x tile
                pl.BlockSpec((1, TR, 128), lambda r, b: (0, r, 0), **pe_kwargs),  # pe (batch-invariant)
            ],
            out_specs=pl.BlockSpec((1, TR, 128), lambda r, b: (b, r, 0)),
        ),
        compiler_params=pltpu.CompilerParams(
            dimension_semantics=semantics,
            vmem_limit_bytes=32 * 1024 * 1024,   # headroom for 2 MiB tiles, safe on v5e/v6e/v7x
        ),
    )(x3, pe3)


def _run_with_fallback(x3, pe3, TR, grid, out_dtype):
    last_err = None
    for semantics, pe_buffers in _config_tiers():
        try:
            return _launch(x3, pe3, TR, grid, out_dtype, semantics, pe_buffers)
        except Exception as err:   # config rejected on this chip / jax version -> try safer tier
            last_err = err
    raise last_err


# --------------------------------------------------------------------------------------
# Forward wrapper
# --------------------------------------------------------------------------------------
def positional_encoding_forward(
    x: jnp.ndarray,
    pe_table: jnp.ndarray,
    *,
    force_pallas: bool = False,
    min_pallas_bytes: int = 256 * 1024,
) -> jnp.ndarray:
    """x: (B, S, D). Returns x + pe[:S] (broadcast over batch)."""
    B, S, D = x.shape
    max_len, d_model = pe_table.shape
    if S > max_len:
        raise ValueError(f"sequence length {S} exceeds positional-encoding max_len {max_len}")
    if D != d_model:
        raise ValueError(f"model-dim mismatch: x has {D}, pe table has {d_model}")

    itemsize = jnp.dtype(x.dtype).itemsize
    pe_slice = pe_table[:S, :].astype(x.dtype)            # cast once: halves pe traffic for bf16 x

    # Tiny-input bypass: a pallas_call's fixed launch/prologue cost dwarfs the work here.
    if not force_pallas and (x.size * itemsize) < min_pallas_bytes:
        return x + pe_slice[None]

    # Lane-dense fold: flatten (S, D), pad tail to a multiple of 128 lanes if needed.
    SD = S * D
    pad = (-SD) % 128
    x_flat = x.reshape(B, SD)
    pe_flat = pe_slice.reshape(1, SD)
    if pad:
        x_flat = jnp.pad(x_flat, ((0, 0), (0, pad)))
        pe_flat = jnp.pad(pe_flat, ((0, 0), (0, pad)))
    R = (SD + pad) // 128
    x3 = x_flat.reshape(B, R, 128)
    pe3 = pe_flat.reshape(1, R, 128)

    # Dtype-aware ~2 MiB tiles (4096 rows f32, 8192 rows bf16); footprint:
    # x(2 bufs) + out(2 bufs) + pe(1 buf) ~= 10 MiB -> under every chip's scoped-VMEM limit.
    target_rows = max(8, ((2 * 1024 * 1024) // (128 * itemsize)) // 8 * 8)
    TR = _pick_row_tile(R, target_rows)
    grid = (pl.cdiv(R, TR), B)

    out3 = _run_with_fallback(x3, pe3, TR, grid, x.dtype)

    out_flat = out3.reshape(B, R * 128)
    if pad:
        out_flat = out_flat[:, :SD]
    return out_flat.reshape(B, S, D)


# --------------------------------------------------------------------------------------
# Test
# --------------------------------------------------------------------------------------
if __name__ == "__main__":
    max_len = 1000

    # Shapes implied by the module: batch=2, seq=8, hidden=32.
    B, S, D = 2, 8, 32
    key = jax.random.PRNGKey(0)
    x = jax.random.normal(key, (B, S, D), dtype=jnp.float32)
    pe_table = _build_pe_table(D, max_len)
    ref = x + pe_table[None, :S, :]

    # 1) Pallas kernel path (forced — default wrapper would bypass at this tiny size).
    out = jax.block_until_ready(positional_encoding_forward(x, pe_table, force_pallas=True))
    assert out.shape == (B, S, D)
    assert jnp.allclose(out, ref, atol=1e-6), "pallas path mismatch vs reference"

    # 2) Default small-input bypass path.
    out_bypass = jax.block_until_ready(positional_encoding_forward(x, pe_table))
    assert jnp.allclose(out_bypass, ref, atol=1e-6), "bypass path mismatch vs reference"

    # 3) Non-128-divisible (S*D) shape exercises the lane-padding branch.
    B2, S2, D2 = 2, 7, 30
    x2 = jax.random.normal(jax.random.PRNGKey(1), (B2, S2, D2), dtype=jnp.float32)
    pe_table2 = _build_pe_table(D2, max_len)
    out2 = jax.block_until_ready(positional_encoding_forward(x2, pe_table2, force_pallas=True))
    ref2 = x2 + pe_table2[None, :S2, :]
    assert jnp.allclose(out2, ref2, atol=1e-6), "padded path mismatch vs reference"

    print("KERNEL_OK")
</pallas_src>

<mosaic_0001>
module attributes {stable_mosaic.version = 11 : i64} {
  func.func @_add_pe_kernel(%arg0: i32, %arg1: i32, %arg2: memref<1x2x128xf32, #tpu.memory_space<vmem>>, %arg3: memref<1x2x128xf32, #tpu.memory_space<vmem>>, %arg4: memref<1x2x128xf32, #tpu.memory_space<vmem>>) attributes {dimension_semantics = [#tpu.dimension_semantics<core_parallel>, #tpu.dimension_semantics<arbitrary>], iteration_bounds = array<i64: 1, 2>, scalar_prefetch = 0 : i64, scratch_operands = 0 : i64, tpu.core_type = #tpu.core_type<tc>, window_params = [{transform_indices = @transform_0, window_bounds = array<i64: 1, 2, 128>}, {pipeline_mode = #tpu.pipeline_mode<synchronous>, transform_indices = @transform_1, window_bounds = array<i64: 1, 2, 128>}, {transform_indices = @transform_2, window_bounds = array<i64: 1, 2, 128>}]} {
    %c0 = arith.constant 0 : index
    %c0_0 = arith.constant 0 : index
    %c0_1 = arith.constant 0 : index
    %0 = vector.load %arg2[%c0, %c0_0, %c0_1] : memref<1x2x128xf32, #tpu.memory_space<vmem>>, vector<1x2x128xf32>
    %c0_2 = arith.constant 0 : index
    %c0_3 = arith.constant 0 : index
    %c0_4 = arith.constant 0 : index
    %1 = vector.load %arg3[%c0_2, %c0_3, %c0_4] : memref<1x2x128xf32, #tpu.memory_space<vmem>>, vector<1x2x128xf32>
    %2 = arith.addf %0, %1 : vector<1x2x128xf32>
    %c0_5 = arith.constant 0 : index
    %c0_6 = arith.constant 0 : index
    %c0_7 = arith.constant 0 : index
    %3 = vector.load %arg4[%c0_5, %c0_6, %c0_7] : memref<1x2x128xf32, #tpu.memory_space<vmem>>, vector<1x2x128xf32>
    tpu.vector_store %arg4[%c0_5, %c0_6, %c0_7], %2 {strides = array<i32>} : memref<1x2x128xf32, #tpu.memory_space<vmem>>, vector<1x2x128xf32>,
    return
  }
  func.func @transform_0(%arg0: i32, %arg1: i32) -> (i32, i32, i32) {
    %c0_i32 = arith.constant 0 : i32
    %c0_i32_0 = arith.constant 0 : i32
    return %arg1, %arg0, %c0_i32 : i32, i32, i32
  }
  func.func @transform_1(%arg0: i32, %arg1: i32) -> (i32, i32, i32) {
    %c0_i32 = arith.constant 0 : i32
    %c0_i32_0 = arith.constant 0 : i32
    %c0_i32_1 = arith.constant 0 : i32
    return %c0_i32, %arg0, %c0_i32_0 : i32, i32, i32
  }
  func.func @transform_2(%arg0: i32, %arg1: i32) -> (i32, i32, i32) {
    %c0_i32 = arith.constant 0 : i32
    %c0_i32_0 = arith.constant 0 : i32
    return %arg1, %arg0, %c0_i32 : i32, i32, i32
  }
}

module attributes {stable_mosaic.version = 11 : i64} {
  func.func @_add_pe_kernel(%arg0: i32, %arg1: i32, %arg2: memref<1x2x128xf32, #tpu.memory_space<vmem>>, %arg3: memref<1x2x128xf32, #tpu.memory_space<vmem>>, %arg4: memref<1x2x128xf32, #tpu.memory_space<vmem>>) attributes {dimension_semantics = [#tpu.dimension_semantics<parallel>, #tpu.dimension_semantics<arbitrary>], iteration_bounds = array<i64: 1, 2>, scalar_prefetch = 0 : i64, scratch_operands = 0 : i64, tpu.core_type = #tpu.core_type<tc>, window_params = [{transform_indices = @transform_0, window_bounds = array<i64: 1, 2, 128>}, {pipeline_mode = #tpu.pipeline_mode<synchronous>, transform_indices = @transform_1, window_bounds = array<i64: 1, 2, 128>}, {transform_indices = @transform_2, window_bounds = array<i64: 1, 2, 128>}]} {
    %c0 = arith.constant 0 : index
    %c0_0 = arith.constant 0 : index
    %c0_1 = arith.constant 0 : index
    %0 = vector.load %arg2[%c0, %c0_0, %c0_1] : memref<1x2x128xf32, #tpu.memory_space<vmem>>, vector<1x2x128xf32>
    %c0_2 = arith.constant 0 : index
    %c0_3 = arith.constant 0 : index
    %c0_4 = arith.constant 0 : index
    %1 = vector.load %arg3[%c0_2, %c0_3, %c0_4] : memref<1x2x128xf32, #tpu.memory_space<vmem>>, vector<1x2x128xf32>
    %2 = arith.addf %0, %1 : vector<1x2x128xf32>
    %c0_5 = arith.constant 0 : index
    %c0_6 = arith.constant 0 : index
    %c0_7 = arith.constant 0 : index
    %3 = vector.load %arg4[%c0_5, %c0_6, %c0_7] : memref<1x2x128xf32, #tpu.memory_space<vmem>>, vector<1x2x128xf32>
    tpu.vector_store %arg4[%c0_5, %c0_6, %c0_7], %2 {strides = array<i32>} : memref<1x2x128xf32, #tpu.memory_space<vmem>>, vector<1x2x128xf32>,
    return
  }
  func.func @transform_0(%arg0: i32, %arg1: i32) -> (i32, i32, i32) {
    %c0_i32 = arith.constant 0 : i32
    %c0_i32_0 = arith.constant 0 : i32
    return %arg1, %arg0, %c0_i32 : i32, i32, i32
  }
  func.func @transform_1(%arg0: i32, %arg1: i32) -> (i32, i32, i32) {
    %c0_i32 = arith.constant 0 : i32
    %c0_i32_0 = arith.constant 0 : i32
    %c0_i32_1 = arith.constant 0 : i32
    return %c0_i32, %arg0, %c0_i32_0 : i32, i32, i32
  }
  func.func @transform_2(%arg0: i32, %arg1: i32) -> (i32, i32, i32) {
    %c0_i32 = arith.constant 0 : i32
    %c0_i32_0 = arith.constant 0 : i32
    return %arg1, %arg0, %c0_i32 : i32, i32, i32
  }
}

module attributes {stable_mosaic.version = 11 : i64} {
  func.func @_add_pe_kernel(%arg0: i32, %arg1: i32, %arg2: memref<1x2x128xf32, #tpu.memory_space<vmem>>, %arg3: memref<1x2x128xf32, #tpu.memory_space<vmem>>, %arg4: memref<1x2x128xf32, #tpu.memory_space<vmem>>) attributes {dimension_semantics = [#tpu.dimension_semantics<parallel>, #tpu.dimension_semantics<arbitrary>], iteration_bounds = array<i64: 1, 2>, scalar_prefetch = 0 : i64, scratch_operands = 0 : i64, tpu.core_type = #tpu.core_type<tc>, window_params = [{transform_indices = @transform_0, window_bounds = array<i64: 1, 2, 128>}, {transform_indices = @transform_1, window_bounds = array<i64: 1, 2, 128>}, {transform_indices = @transform_2, window_bounds = array<i64: 1, 2, 128>}]} {
    %c0 = arith.constant 0 : index
    %c0_0 = arith.constant 0 : index
    %c0_1 = arith.constant 0 : index
    %0 = vector.load %arg2[%c0, %c0_0, %c0_1] : memref<1x2x128xf32, #tpu.memory_space<vmem>>, vector<1x2x128xf32>
    %c0_2 = arith.constant 0 : index
    %c0_3 = arith.constant 0 : index
    %c0_4 = arith.constant 0 : index
    %1 = vector.load %arg3[%c0_2, %c0_3, %c0_4] : memref<1x2x128xf32, #tpu.memory_space<vmem>>, vector<1x2x128xf32>
    %2 = arith.addf %0, %1 : vector<1x2x128xf32>
    %c0_5 = arith.constant 0 : index
    %c0_6 = arith.constant 0 : index
    %c0_7 = arith.constant 0 : index
    %3 = vector.load %arg4[%c0_5, %c0_6, %c0_7] : memref<1x2x128xf32, #tpu.memory_space<vmem>>, vector<1x2x128xf32>
    tpu.vector_store %arg4[%c0_5, %c0_6, %c0_7], %2 {strides = array<i32>} : memref<1x2x128xf32, #tpu.memory_space<vmem>>, vector<1x2x128xf32>,
    return
  }
  func.func @transform_0(%arg0: i32, %arg1: i32) -> (i32, i32, i32) {
    %c0_i32 = arith.constant 0 : i32
    %c0_i32_0 = arith.constant 0 : i32
    return %arg1, %arg0, %c0_i32 : i32, i32, i32
  }
  func.func @transform_1(%arg0: i32, %arg1: i32) -> (i32, i32, i32) {
    %c0_i32 = arith.constant 0 : i32
    %c0_i32_0 = arith.constant 0 : i32
    %c0_i32_1 = arith.constant 0 : i32
    return %c0_i32, %arg0, %c0_i32_0 : i32, i32, i32
  }
  func.func @transform_2(%arg0: i32, %arg1: i32) -> (i32, i32, i32) {
    %c0_i32 = arith.constant 0 : i32
    %c0_i32_0 = arith.constant 0 : i32
    return %arg1, %arg0, %c0_i32 : i32, i32, i32
  }
}

</mosaic_0001>

<llo_original>
// kernel: tpu_custom_call.1
$region0: #{tpu_custom_call.1}
  #allocation0 [shape = 'u32[]', space=smem, size = 0x4, offset = 0x4, fixed_abs, tag = 'smem constant byte address 0x4 - core index']
  #allocation1 [shape = 'u32[144,128]{1,0:T(1,128)}', space=vmem, size = 0x12000, scoped, tag = 'internal scratch']
  %s0 = inlined_call_operand.hbm [shape: f32[2,2,128], index: 0, kind: input, shape index: {}]
  %s1 = inlined_call_operand.vmem [shape: f32[1,2,128], index: 1, kind: input, shape index: {}]
  %s2 = inlined_call_operand.hbm [shape: f32[2,2,128], index: 2, kind: output, shape index: {}]
  %s3 = sld [smem:[#allocation0]]
  $region45: #{tpu_custom_call.1} parent=0
    _
  %s5 = ssub.s32 1, %s3
  %s6 = scalar_select 0, %s5, %s3
  $region1: #{tpu_custom_call.1} parent=0
    #allocation2 [shape = 'u8[2048]{0}', space=vmem, size = 0x800, scoped, tag = 'input window, operand 0']
    #allocation3 [shape = 's32[2]{0}', space=sflag, size = 0x8, scoped, tag = 'scoped memory for tpu_custom_call.1']
    #allocation4 [shape = 's32[2]{0}', space=sflag, size = 0x8, scoped, tag = 'scoped memory for tpu_custom_call.1']
    #allocation5 [shape = 'u8[2048]{0}', space=vmem, size = 0x800, scoped, tag = 'output window, operand 0']
    %7 = vsyncpa [#allocation3], 0
    %s8 = scalar_lea.sflag [#allocation3], 1
    %9 = vsyncpa %s8, 0
    %10 = vsyncpa [#allocation4], 0
    %s11 = scalar_lea.sflag [#allocation4], 1
    %12 = vsyncpa %s11, 0
    loop: start=0, step=1, limit=4
    $region2: #{tpu_custom_call.1} parent=1 // loop_pre_header
      _
    $region3: #{tpu_custom_call.1} parent=1 // loop_header
      %s14 = sphi 0, %s18
      %p15 = scmp.ge.s32.totalorder %s14, 4
      %s21 = sphi 0, %s33
      %s22 = sphi 0, %s29
      %s23 = sphi 0, %s21
      %s24 = sphi 0, %s22
      %s25 = sphi 0, %s23
      %s26 = sphi 0, %s24
      %s40 = sphi 0, %s42
      %s43 = sphi 0, %s40
      %s44 = sphi 0, %s43
      %s60 = sphi 0, %s44
      %s68 = sphi 0, %s70
      %s71 = sphi 0, %s68
      %s72 = sphi 0, %s71
      %s88 = sphi 0, %s72
      %s98 = sphi 0, %s100
      %s101 = sphi 0, %s98
      %s102 = sphi 0, %s101
      %s118 = sphi 0, %s102
    $region4: #{tpu_custom_call.1} parent=1 // loop_header_branch
      %17 = sbr.rel (%p15) target = $region8
    $region5: #{tpu_custom_call.1} parent=1 // loop_body
      %s19 = ssub.s32 %s14, 1
      %s20 = ssub.s32 %s14, 2
      %s27 = sadd.s32 1, %s22
      %p28 = scmp.ge.s32.totalorder %s27, 2
      %s29 = scalar_select %p28, 0, %s27
      %s30 = sadd.s32 1, %s21
      %s31 = scalar_select %p28, %s30, %s21
      %p32 = scmp.ge.s32.totalorder %s31, 1
      %s33 = scalar_select %p32, 0, %s31
      %s34 = sadd.s32 %s21, %s6
      %s35 = sadd.s32 %s33, %s6
      %s36 = ssub.s32 %s22, %s29
      %s37 = ssub.s32 %s34, %s35
      %s38 = sor.u32 %s36, %s37
      %p39 = scmp.eq.s32.totalorder %s38, 0
      %s41 = sadd.s32 %s40, 1
      %s42 = scalar_select %p39, %s40, %s41
      %p45 = pneg %p39
      %p46 = scmp.eq.s32.totalorder %s14, 1
      %p47 = por %p45, %p46
      %p48 = scmp.ne.s32.totalorder %s40, %s43
      %p49 = scmp.eq.s32.totalorder %s14, 0
      %p50 = por %p48, %p49
      %p51 = scmp.ne.s32.totalorder %s40, %s43
      %p52 = scmp.eq.s32.totalorder %s19, 1
      %p53 = por %p51, %p52
      %p54 = scmp.ne.s32.totalorder %s43, %s44
      %p55 = scmp.eq.s32.totalorder %s19, 0
      %p56 = por %p54, %p55
      %p57 = scmp.ne.s32.totalorder %s43, %s44
      %p58 = scmp.eq.s32.totalorder %s20, 1
      %p59 = por %p57, %p58
      %p61 = scmp.ne.s32.totalorder %s44, %s60
      %p62 = scmp.eq.s32.totalorder %s20, 0
      %p63 = por %p61, %p62
      %s64 = sadd.s32 %s21, %s6
      %s65 = sadd.s32 %s33, %s6
      %s66 = ssub.s32 %s64, %s65
      %p67 = scmp.eq.s32.totalorder %s66, 0
      %s69 = sadd.s32 %s68, 1
      %s70 = scalar_select %p67, %s68, %s69
      %p73 = pneg %p67
      %p74 = scmp.eq.s32.totalorder %s14, 1
      %p75 = por %p73, %p74
      %p76 = scmp.ne.s32.totalorder %s68, %s71
      %p77 = scmp.eq.s32.totalorder %s14, 0
      %p78 = por %p76, %p77
      %p79 = scmp.ne.s32.totalorder %s68, %s71
      %p80 = scmp.eq.s32.totalorder %s19, 1
      %p81 = por %p79, %p80
      %p82 = scmp.ne.s32.totalorder %s71, %s72
      %p83 = scmp.eq.s32.totalorder %s19, 0
      %p84 = por %p82, %p83
      %p85 = scmp.ne.s32.totalorder %s71, %s72
      %p86 = scmp.eq.s32.totalorder %s20, 1
      %p87 = por %p85, %p86
      %p89 = scmp.ne.s32.totalorder %s72, %s88
      %p90 = scmp.eq.s32.totalorder %s20, 0
      %p91 = por %p89, %p90
      %s92 = sadd.s32 %s21, %s6
      %s93 = sadd.s32 %s33, %s6
      %s94 = ssub.s32 %s22, %s29
      %s95 = ssub.s32 %s92, %s93
      %s96 = sor.u32 %s94, %s95
      %p97 = scmp.eq.s32.totalorder %s96, 0
      %s99 = sadd.s32 %s98, 1
      %s100 = scalar_select %p97, %s98, %s99
      %p103 = pneg %p97
      %p104 = scmp.eq.s32.totalorder %s14, 1
      %p105 = por %p103, %p104
      %p106 = scmp.ne.s32.totalorder %s98, %s101
      %p107 = scmp.eq.s32.totalorder %s14, 0
      %p108 = por %p106, %p107
      %p109 = scmp.ne.s32.totalorder %s98, %s101
      %p110 = scmp.eq.s32.totalorder %s19, 1
      %p111 = por %p109, %p110
      %p112 = scmp.ne.s32.totalorder %s101, %s102
      %p113 = scmp.eq.s32.totalorder %s19, 0
      %p114 = por %p112, %p113
      %p115 = scmp.ne.s32.totalorder %s101, %s102
      %p116 = scmp.eq.s32.totalorder %s20, 1
      %p117 = por %p115, %p116
      %p119 = scmp.ne.s32.totalorder %s102, %s118
      %p120 = scmp.eq.s32.totalorder %s20, 0
      %p121 = por %p119, %p120
      %p122 = scmp.le.s32.totalorder 1, %s14
      %p123 = scmp.lt.s32.totalorder %s14, 3
      %p124 = pnand %p122, %p123
      %p125 = pneg %p124
      // Predicated region
      $region9: #{tpu_custom_call.1} parent=5 // pred_check
        _
      $region10: #{tpu_custom_call.1} parent=5 // pred_check_branch
        %127 = sbr.rel (%p124) target = $region12
      $region11: #{tpu_custom_call.1} parent=5 // pred_region
        %s128 = ssub.s32 %s14, 1
        // Predicated region
        $region13: #{tpu_custom_call.1} parent=11 // pred_check
          %p129 = pneg %p84
        $region14: #{tpu_custom_call.1} parent=11 // pred_check_branch
          %131 = sbr.rel (%p129) target = $region16
        $region15: #{tpu_custom_call.1} parent=11 // pred_region
          %s132 = sadd.s32 %s23, %s6
          %p133 = scmp.lt.s32.totalorder %s132, 0
          %s134 = scalar_select %p133, %s132, 0
          %s135 = smul.addr %s134, 2
          %s136 = scalar_lea.vmem %s1, %s135
          %s137 = sadd.s32 %s23, %s6
        $region16: #{tpu_custom_call.1} parent=11 // pred_fallthru
          _
      $region12: #{tpu_custom_call.1} parent=5 // pred_fallthru
        _
      %p138 = scmp.lt.s32.totalorder %s14, 2
      // Predicated region
      $region17: #{tpu_custom_call.1} parent=5 // pred_check
        %p139 = pneg %p138
      $region18: #{tpu_custom_call.1} parent=5 // pred_check_branch
        %141 = sbr.rel (%p139) target = $region20
      $region19: #{tpu_custom_call.1} parent=5 // pred_region
        // Predicated region
        $region21: #{tpu_custom_call.1} parent=19 // pred_check
          %p142 = pneg %p50
        $region22: #{tpu_custom_call.1} parent=19 // pred_check_branch
          %144 = sbr.rel (%p142) target = $region24
        $region23: #{tpu_custom_call.1} parent=19 // pred_region
          %s145 = sand.u32 %s40, 1
          %s146 = scalar_lea.sflag [#allocation3], %s145
          %s147 = sand.u32 %s40, 1
          %s148 = smul.addr %s147, 2
          %s149 = scalar_lea.vmem [#allocation2], %s148
          %s150 = sadd.s32 %s21, %s6
          %s152 = ssub.s32 32, 32
          %153 = vsyncadd %s146, %s152
          %s154 = sadd.s32 %s150, %s22
          %s155 = smul.addr %s154, 32
          %s156 = scalar_lea.hbm %s0, %s155
          %s158 = sshll.u32 %s149, 4
          %s159 = int_to_ptr.vmem [resolvable:$true] %s158
          %161 = dma.hbm_to_vmem [thread:$0]  %s156, 32, %s159, %s146
        $region24: #{tpu_custom_call.1} parent=19 // pred_fallthru
          _
      $region20: #{tpu_custom_call.1} parent=5 // pred_fallthru
        _
      %p162 = scmp.le.s32.totalorder 1, %s14
      %p163 = scmp.lt.s32.totalorder %s14, 3
      %p164 = pnand %p162, %p163
      %p165 = pneg %p164
      // Predicated region
      $region25: #{tpu_custom_call.1} parent=5 // pred_check
        _
      $region26: #{tpu_custom_call.1} parent=5 // pred_check_branch
        %167 = sbr.rel (%p164) target = $region28
      $region27: #{tpu_custom_call.1} parent=5 // pred_region
        %s168 = ssub.s32 %s14, 1
        %s169 = sand.u32 %s43, 1
        %s170 = scalar_lea.sflag [#allocation3], %s169
        %s171 = sand.u32 %s43, 1
        %s172 = smul.addr %s171, 2
        %s173 = scalar_lea.vmem [#allocation2], %s172
        // Predicated region
        $region29: #{tpu_custom_call.1} parent=27 // pred_check
          %p174 = pneg %p56
        $region30: #{tpu_custom_call.1} parent=27 // pred_check_branch
          %176 = sbr.rel (%p174) target = $region32
        $region31: #{tpu_custom_call.1} parent=27 // pred_region
          %177 = dma.done %s170, 32
        $region32: #{tpu_custom_call.1} parent=27 // pred_fallthru
          _
        %s178 = sand.u32 %s43, 1
        %s179 = scalar_lea.sflag [#allocation3], %s178
        %s180 = sand.u32 %s43, 1
        %s181 = smul.addr %s180, 2
        %s182 = scalar_lea.vmem [#allocation2], %s181
        %p183 = pneg %p56
        %p184 = pneg %p53
        %s185 = sadd.s32 %s23, %s6
        %p186 = scmp.lt.s32.totalorder %s185, 0
        %s187 = scalar_select %p186, %s185, 0
        %s188 = smul.addr %s187, 2
        %s189 = scalar_lea.vmem %s1, %s188
        %p190 = pneg %p84
        %p191 = pneg %p81
        %p192 = pneg %p114
        %p193 = pneg %p111
        %s194 = sand.u32 %s101, 1
        %s195 = scalar_lea.sflag [#allocation4], %s194
        %s196 = sand.u32 %s101, 1
        %s197 = smul.addr %s196, 2
        %s198 = scalar_lea.vmem [#allocation5], %s197
        %s199 = sadd.s32 %s23, %s6
        %s200 = sadd.s32 %s23, %s6
        %p201 = scmp.lt.s32.totalorder %s200, 0
        %s202 = scalar_select %p201, %s200, 0
        %s203 = smul.addr %s202, 2
        %s204 = scalar_lea.vmem %s1, %s203
        %s205 = sadd.s32 %s23, %s6
        %s206 = sadd.s32 %s23, %s6
        %s207 = sadd.s32 %s23, %s6
        %v208 = vld [vmem:[%s173] sm:$0x3]
        %v209 = vld [vmem:[%s204] sm:$0x3]
        %v210 = vadd.f32 %v208, %v209
        %211 = vst [vmem:[%s198] sm:$0x3] %v210
        %s212 = sand.u32 %s101, 1
        %s213 = scalar_lea.sflag [#allocation4], %s212
        %s214 = sand.u32 %s101, 1
        %s215 = smul.addr %s214, 2
        %s216 = scalar_lea.vmem [#allocation5], %s215
        // Predicated region
        $region33: #{tpu_custom_call.1} parent=27 // pred_check
          %p217 = pneg %p111
        $region34: #{tpu_custom_call.1} parent=27 // pred_check_branch
          %219 = sbr.rel (%p217) target = $region36
        $region35: #{tpu_custom_call.1} parent=27 // pred_region
          %s220 = sadd.s32 %s23, %s6
          %s222 = ssub.s32 32, 32
          %223 = vsyncadd %s213, %s222
          %s224 = sadd.s32 %s220, %s24
          %s225 = smul.addr %s224, 32
          %s226 = scalar_lea.hbm %s2, %s225
          %s228 = sshll.u32 %s216, 4
          %s229 = int_to_ptr.vmem [resolvable:$true] %s228
          %231 = dma.vmem_to_hbm [thread:$0]  %s229, 32, %s226, %s213
        $region36: #{tpu_custom_call.1} parent=27 // pred_fallthru
          _
      $region28: #{tpu_custom_call.1} parent=5 // pred_fallthru
        _
      %p232 = scmp.le.s32.totalorder 2, %s14
      // Predicated region
      $region37: #{tpu_custom_call.1} parent=5 // pred_check
        %p233 = pneg %p232
      $region38: #{tpu_custom_call.1} parent=5 // pred_check_branch
        %235 = sbr.rel (%p233) target = $region40
      $region39: #{tpu_custom_call.1} parent=5 // pred_region
        %s236 = ssub.s32 %s14, 2
        // Predicated region
        $region41: #{tpu_custom_call.1} parent=39 // pred_check
          %p237 = pneg %p117
        $region42: #{tpu_custom_call.1} parent=39 // pred_check_branch
          %239 = sbr.rel (%p237) target = $region44
        $region43: #{tpu_custom_call.1} parent=39 // pred_region
          %s240 = sand.u32 %s102, 1
          %s241 = scalar_lea.sflag [#allocation4], %s240
          %s242 = sand.u32 %s102, 1
          %s243 = smul.addr %s242, 2
          %s244 = scalar_lea.vmem [#allocation5], %s243
          %245 = dma.done %s241, 32
        $region44: #{tpu_custom_call.1} parent=39 // pred_fallthru
          _
      $region40: #{tpu_custom_call.1} parent=5 // pred_fallthru
        _
    $region6: #{tpu_custom_call.1} parent=1 // loop_footer
      %s18 = sadd.s32 1, %s14
    $region7: #{tpu_custom_call.1} parent=1 // loop_footer_branch
      %13 = sbr.rel target = $region3
    $region8: #{tpu_custom_call.1} parent=1 // loop_exit
      _
    %246 = vsyncpa [#allocation3], 1
    %s247 = scalar_lea.sflag [#allocation3], 1
    %248 = vsyncpa %s247, 1
    %249 = vsyncpa [#allocation4], 1
    %s250 = scalar_lea.sflag [#allocation4], 1
    %251 = vsyncpa %s250, 1

// kernel: tpu_custom_call.1
$region0: #{tpu_custom_call.1}
  #allocation0 [shape = 'u32[]', space=smem, size = 0x4, offset = 0x4, fixed_abs, tag = 'smem constant byte address 0x4 - core index']
  #allocation1 [shape = 'u32[144,128]{1,0:T(1,128)}', space=vmem, size = 0x12000, scoped, tag = 'internal scratch']
  %s0 = inlined_call_operand.hbm [shape: f32[2,2,128], index: 0, kind: input, shape index: {}]
  %s1 = inlined_call_operand.vmem [shape: f32[1,2,128], index: 1, kind: input, shape index: {}]
  %s2 = inlined_call_operand.hbm [shape: f32[2,2,128], index: 2, kind: output, shape index: {}]
  %s3 = sld [smem:[#allocation0]]
  $region45: #{tpu_custom_call.1} parent=0
    _
  %s5 = ssub.s32 1, %s3
  %s6 = scalar_select 0, %s5, %s3
  $region1: #{tpu_custom_call.1} parent=0
    #allocation2 [shape = 'u8[2048]{0}', space=vmem, size = 0x800, scoped, tag = 'input window, operand 0']
    #allocation3 [shape = 's32[2]{0}', space=sflag, size = 0x8, scoped, tag = 'scoped memory for tpu_custom_call.1']
    #allocation4 [shape = 's32[2]{0}', space=sflag, size = 0x8, scoped, tag = 'scoped memory for tpu_custom_call.1']
    #allocation5 [shape = 'u8[2048]{0}', space=vmem, size = 0x800, scoped, tag = 'output window, operand 0']
    %7 = vsyncpa [#allocation3], 0
    %s8 = scalar_lea.sflag [#allocation3], 1
    %9 = vsyncpa %s8, 0
    %10 = vsyncpa [#allocation4], 0
    %s11 = scalar_lea.sflag [#allocation4], 1
    %12 = vsyncpa %s11, 0
    loop: start=0, step=1, limit=4
    $region2: #{tpu_custom_call.1} parent=1 // loop_pre_header
      _
    $region3: #{tpu_custom_call.1} parent=1 // loop_header
      %s14 = sphi 0, %s18
      %p15 = scmp.ge.s32.totalorder %s14, 4
      %s21 = sphi 0, %s33
      %s22 = sphi 0, %s29
      %s23 = sphi 0, %s21
      %s24 = sphi 0, %s22
      %s25 = sphi 0, %s23
      %s26 = sphi 0, %s24
      %s38 = sphi 0, %s40
      %s41 = sphi 0, %s38
      %s42 = sphi 0, %s41
      %s58 = sphi 0, %s42
      %s64 = sphi 0, %s66
      %s67 = sphi 0, %s64
      %s68 = sphi 0, %s67
      %s84 = sphi 0, %s68
      %s92 = sphi 0, %s94
      %s95 = sphi 0, %s92
      %s96 = sphi 0, %s95
      %s112 = sphi 0, %s96
    $region4: #{tpu_custom_call.1} parent=1 // loop_header_branch
      %17 = sbr.rel (%p15) target = $region8
    $region5: #{tpu_custom_call.1} parent=1 // loop_body
      %s19 = ssub.s32 %s14, 1
      %s20 = ssub.s32 %s14, 2
      %s27 = sadd.s32 1, %s22
      %p28 = scmp.ge.s32.totalorder %s27, 2
      %s29 = scalar_select %p28, 0, %s27
      %s30 = sadd.s32 1, %s21
      %s31 = scalar_select %p28, %s30, %s21
      %p32 = scmp.ge.s32.totalorder %s31, 1
      %s33 = scalar_select %p32, 0, %s31
      %s34 = ssub.s32 %s22, %s29
      %s35 = ssub.s32 %s21, %s33
      %s36 = sor.u32 %s34, %s35
      %p37 = scmp.eq.s32.totalorder %s36, 0
      %s39 = sadd.s32 %s38, 1
      %s40 = scalar_select %p37, %s38, %s39
      %p43 = pneg %p37
      %p44 = scmp.eq.s32.totalorder %s14, 1
      %p45 = por %p43, %p44
      %p46 = scmp.ne.s32.totalorder %s38, %s41
      %p47 = scmp.eq.s32.totalorder %s14, 0
      %p48 = por %p46, %p47
      %p49 = scmp.ne.s32.totalorder %s38, %s41
      %p50 = scmp.eq.s32.totalorder %s19, 1
      %p51 = por %p49, %p50
      %p52 = scmp.ne.s32.totalorder %s41, %s42
      %p53 = scmp.eq.s32.totalorder %s19, 0
      %p54 = por %p52, %p53
      %p55 = scmp.ne.s32.totalorder %s41, %s42
      %p56 = scmp.eq.s32.totalorder %s20, 1
      %p57 = por %p55, %p56
      %p59 = scmp.ne.s32.totalorder %s42, %s58
      %p60 = scmp.eq.s32.totalorder %s20, 0
      %p61 = por %p59, %p60
      %s62 = ssub.s32 %s21, %s33
      %p63 = scmp.eq.s32.totalorder %s62, 0
      %s65 = sadd.s32 %s64, 1
      %s66 = scalar_select %p63, %s64, %s65
      %p69 = pneg %p63
      %p70 = scmp.eq.s32.totalorder %s14, 1
      %p71 = por %p69, %p70
      %p72 = scmp.ne.s32.totalorder %s64, %s67
      %p73 = scmp.eq.s32.totalorder %s14, 0
      %p74 = por %p72, %p73
      %p75 = scmp.ne.s32.totalorder %s64, %s67
      %p76 = scmp.eq.s32.totalorder %s19, 1
      %p77 = por %p75, %p76
      %p78 = scmp.ne.s32.totalorder %s67, %s68
      %p79 = scmp.eq.s32.totalorder %s19, 0
      %p80 = por %p78, %p79
      %p81 = scmp.ne.s32.totalorder %s67, %s68
      %p82 = scmp.eq.s32.totalorder %s20, 1
      %p83 = por %p81, %p82
      %p85 = scmp.ne.s32.totalorder %s68, %s84
      %p86 = scmp.eq.s32.totalorder %s20, 0
      %p87 = por %p85, %p86
      %s88 = ssub.s32 %s22, %s29
      %s89 = ssub.s32 %s21, %s33
      %s90 = sor.u32 %s88, %s89
      %p91 = scmp.eq.s32.totalorder %s90, 0
      %s93 = sadd.s32 %s92, 1
      %s94 = scalar_select %p91, %s92, %s93
      %p97 = pneg %p91
      %p98 = scmp.eq.s32.totalorder %s14, 1
      %p99 = por %p97, %p98
      %p100 = scmp.ne.s32.totalorder %s92, %s95
      %p101 = scmp.eq.s32.totalorder %s14, 0
      %p102 = por %p100, %p101
      %p103 = scmp.ne.s32.totalorder %s92, %s95
      %p104 = scmp.eq.s32.totalorder %s19, 1
      %p105 = por %p103, %p104
      %p106 = scmp.ne.s32.totalorder %s95, %s96
      %p107 = scmp.eq.s32.totalorder %s19, 0
      %p108 = por %p106, %p107
      %p109 = scmp.ne.s32.totalorder %s95, %s96
      %p110 = scmp.eq.s32.totalorder %s20, 1
      %p111 = por %p109, %p110
      %p113 = scmp.ne.s32.totalorder %s96, %s112
      %p114 = scmp.eq.s32.totalorder %s20, 0
      %p115 = por %p113, %p114
      %p116 = scmp.le.s32.totalorder 1, %s14
      %p117 = scmp.lt.s32.totalorder %s14, 3
      %p118 = pnand %p116, %p117
      %p119 = pneg %p118
      // Predicated region
      $region9: #{tpu_custom_call.1} parent=5 // pred_check
        _
      $region10: #{tpu_custom_call.1} parent=5 // pred_check_branch
        %121 = sbr.rel (%p118) target = $region12
      $region11: #{tpu_custom_call.1} parent=5 // pred_region
        %s122 = ssub.s32 %s14, 1
        // Predicated region
        $region13: #{tpu_custom_call.1} parent=11 // pred_check
          %p123 = pneg %p80
        $region14: #{tpu_custom_call.1} parent=11 // pred_check_branch
          %125 = sbr.rel (%p123) target = $region16
        $region15: #{tpu_custom_call.1} parent=11 // pred_region
          %p126 = scmp.lt.s32.totalorder %s23, 0
          %s127 = scalar_select %p126, %s23, 0
          %s128 = smul.addr %s127, 2
          %s129 = scalar_lea.vmem %s1, %s128
        $region16: #{tpu_custom_call.1} parent=11 // pred_fallthru
          _
      $region12: #{tpu_custom_call.1} parent=5 // pred_fallthru
        _
      %p130 = scmp.lt.s32.totalorder %s14, 2
      // Predicated region
      $region17: #{tpu_custom_call.1} parent=5 // pred_check
        %p131 = pneg %p130
      $region18: #{tpu_custom_call.1} parent=5 // pred_check_branch
        %133 = sbr.rel (%p131) target = $region20
      $region19: #{tpu_custom_call.1} parent=5 // pred_region
        // Predicated region
        $region21: #{tpu_custom_call.1} parent=19 // pred_check
          %p134 = pneg %p48
        $region22: #{tpu_custom_call.1} parent=19 // pred_check_branch
          %136 = sbr.rel (%p134) target = $region24
        $region23: #{tpu_custom_call.1} parent=19 // pred_region
          %s137 = sand.u32 %s38, 1
          %s138 = scalar_lea.sflag [#allocation3], %s137
          %s139 = sand.u32 %s38, 1
          %s140 = smul.addr %s139, 2
          %s141 = scalar_lea.vmem [#allocation2], %s140
          %s143 = ssub.s32 32, 32
          %144 = vsyncadd %s138, %s143
          %s145 = sadd.s32 %s21, %s22
          %s146 = smul.addr %s145, 32
          %s147 = scalar_lea.hbm %s0, %s146
          %s149 = sshll.u32 %s141, 4
          %s150 = int_to_ptr.vmem [resolvable:$true] %s149
          %152 = dma.hbm_to_vmem [thread:$0]  %s147, 32, %s150, %s138
        $region24: #{tpu_custom_call.1} parent=19 // pred_fallthru
          _
      $region20: #{tpu_custom_call.1} parent=5 // pred_fallthru
        _
      %p153 = scmp.le.s32.totalorder 1, %s14
      %p154 = scmp.lt.s32.totalorder %s14, 3
      %p155 = pnand %p153, %p154
      %p156 = pneg %p155
      // Predicated region
      $region25: #{tpu_custom_call.1} parent=5 // pred_check
        _
      $region26: #{tpu_custom_call.1} parent=5 // pred_check_branch
        %158 = sbr.rel (%p155) target = $region28
      $region27: #{tpu_custom_call.1} parent=5 // pred_region
        %s159 = ssub.s32 %s14, 1
        %s160 = sand.u32 %s41, 1
        %s161 = scalar_lea.sflag [#allocation3], %s160
        %s162 = sand.u32 %s41, 1
        %s163 = smul.addr %s162, 2
        %s164 = scalar_lea.vmem [#allocation2], %s163
        // Predicated region
        $region29: #{tpu_custom_call.1} parent=27 // pred_check
          %p165 = pneg %p54
        $region30: #{tpu_custom_call.1} parent=27 // pred_check_branch
          %167 = sbr.rel (%p165) target = $region32
        $region31: #{tpu_custom_call.1} parent=27 // pred_region
          %168 = dma.done %s161, 32
        $region32: #{tpu_custom_call.1} parent=27 // pred_fallthru
          _
        %s169 = sand.u32 %s41, 1
        %s170 = scalar_lea.sflag [#allocation3], %s169
        %s171 = sand.u32 %s41, 1
        %s172 = smul.addr %s171, 2
        %s173 = scalar_lea.vmem [#allocation2], %s172
        %p174 = pneg %p54
        %p175 = pneg %p51
        %p176 = scmp.lt.s32.totalorder %s23, 0
        %s177 = scalar_select %p176, %s23, 0
        %s178 = smul.addr %s177, 2
        %s179 = scalar_lea.vmem %s1, %s178
        %p180 = pneg %p80
        %p181 = pneg %p77
        %p182 = pneg %p108
        %p183 = pneg %p105
        %s184 = sand.u32 %s95, 1
        %s185 = scalar_lea.sflag [#allocation4], %s184
        %s186 = sand.u32 %s95, 1
        %s187 = smul.addr %s186, 2
        %s188 = scalar_lea.vmem [#allocation5], %s187
        %p189 = scmp.lt.s32.totalorder %s23, 0
        %s190 = scalar_select %p189, %s23, 0
        %s191 = smul.addr %s190, 2
        %s192 = scalar_lea.vmem %s1, %s191
        %v193 = vld [vmem:[%s164] sm:$0x3]
        %v194 = vld [vmem:[%s192] sm:$0x3]
        %v195 = vadd.f32 %v193, %v194
        %196 = vst [vmem:[%s188] sm:$0x3] %v195
        %s197 = sand.u32 %s95, 1
        %s198 = scalar_lea.sflag [#allocation4], %s197
        %s199 = sand.u32 %s95, 1
        %s200 = smul.addr %s199, 2
        %s201 = scalar_lea.vmem [#allocation5], %s200
        // Predicated region
        $region33: #{tpu_custom_call.1} parent=27 // pred_check
          %p202 = pneg %p105
        $region34: #{tpu_custom_call.1} parent=27 // pred_check_branch
          %204 = sbr.rel (%p202) target = $region36
        $region35: #{tpu_custom_call.1} parent=27 // pred_region
          %s206 = ssub.s32 32, 32
          %207 = vsyncadd %s198, %s206
          %s208 = sadd.s32 %s23, %s24
          %s209 = smul.addr %s208, 32
          %s210 = scalar_lea.hbm %s2, %s209
          %s212 = sshll.u32 %s201, 4
          %s213 = int_to_ptr.vmem [resolvable:$true] %s212
          %215 = dma.vmem_to_hbm [thread:$0]  %s213, 32, %s210, %s198
        $region36: #{tpu_custom_call.1} parent=27 // pred_fallthru
          _
      $region28: #{tpu_custom_call.1} parent=5 // pred_fallthru
        _
      %p216 = scmp.le.s32.totalorder 2, %s14
      // Predicated region
      $region37: #{tpu_custom_call.1} parent=5 // pred_check
        %p217 = pneg %p216
      $region38: #{tpu_custom_call.1} parent=5 // pred_check_branch
        %219 = sbr.rel (%p217) target = $region40
      $region39: #{tpu_custom_call.1} parent=5 // pred_region
        %s220 = ssub.s32 %s14, 2
        // Predicated region
        $region41: #{tpu_custom_call.1} parent=39 // pred_check
          %p221 = pneg %p111
        $region42: #{tpu_custom_call.1} parent=39 // pred_check_branch
          %223 = sbr.rel (%p221) target = $region44
        $region43: #{tpu_custom_call.1} parent=39 // pred_region
          %s224 = sand.u32 %s96, 1
          %s225 = scalar_lea.sflag [#allocation4], %s224
          %s226 = sand.u32 %s96, 1
          %s227 = smul.addr %s226, 2
          %s228 = scalar_lea.vmem [#allocation5], %s227
          %229 = dma.done %s225, 32
        $region44: #{tpu_custom_call.1} parent=39 // pred_fallthru
          _
      $region40: #{tpu_custom_call.1} parent=5 // pred_fallthru
        _
    $region6: #{tpu_custom_call.1} parent=1 // loop_footer
      %s18 = sadd.s32 1, %s14
    $region7: #{tpu_custom_call.1} parent=1 // loop_footer_branch
      %13 = sbr.rel target = $region3
    $region8: #{tpu_custom_call.1} parent=1 // loop_exit
      _
    %230 = vsyncpa [#allocation3], 1
    %s231 = scalar_lea.sflag [#allocation3], 1
    %232 = vsyncpa %s231, 1
    %233 = vsyncpa [#allocation4], 1
    %s234 = scalar_lea.sflag [#allocation4], 1
    %235 = vsyncpa %s234, 1

// kernel: tpu_custom_call.1
$region0: #{tpu_custom_call.1}
  #allocation0 [shape = 'u32[]', space=smem, size = 0x4, offset = 0x4, fixed_abs, tag = 'smem constant byte address 0x4 - core index']
  #allocation1 [shape = 'u32[144,128]{1,0:T(1,128)}', space=vmem, size = 0x12000, scoped, tag = 'internal scratch']
  %s0 = inlined_call_operand.hbm [shape: f32[2,2,128], index: 0, kind: input, shape index: {}]
  %s1 = inlined_call_operand.vmem [shape: f32[1,2,128], index: 1, kind: input, shape index: {}]
  %s2 = inlined_call_operand.hbm [shape: f32[2,2,128], index: 2, kind: output, shape index: {}]
  %s3 = sld [smem:[#allocation0]]
  $region45: #{tpu_custom_call.1} parent=0
    _
  %s5 = ssub.s32 1, %s3
  %s6 = scalar_select 0, %s5, %s3
  $region1: #{tpu_custom_call.1} parent=0
    #allocation2 [shape = 'u8[2048]{0}', space=vmem, size = 0x800, scoped, tag = 'input window, operand 0']
    #allocation3 [shape = 's32[2]{0}', space=sflag, size = 0x8, scoped, tag = 'scoped memory for tpu_custom_call.1']
    #allocation4 [shape = 's32[2]{0}', space=sflag, size = 0x8, scoped, tag = 'scoped memory for tpu_custom_call.1']
    #allocation5 [shape = 'u8[2048]{0}', space=vmem, size = 0x800, scoped, tag = 'output window, operand 0']
    %7 = vsyncpa [#allocation3], 0
    %s8 = scalar_lea.sflag [#allocation3], 1
    %9 = vsyncpa %s8, 0
    %10 = vsyncpa [#allocation4], 0
    %s11 = scalar_lea.sflag [#allocation4], 1
    %12 = vsyncpa %s11, 0
    loop: start=0, step=1, limit=4
    $region2: #{tpu_custom_call.1} parent=1 // loop_pre_header
      _
    $region3: #{tpu_custom_call.1} parent=1 // loop_header
      %s14 = sphi 0, %s18
      %p15 = scmp.ge.s32.totalorder %s14, 4
      %s21 = sphi 0, %s33
      %s22 = sphi 0, %s29
      %s23 = sphi 0, %s21
      %s24 = sphi 0, %s22
      %s25 = sphi 0, %s23
      %s26 = sphi 0, %s24
      %s38 = sphi 0, %s40
      %s41 = sphi 0, %s38
      %s42 = sphi 0, %s41
      %s58 = sphi 0, %s42
      %s64 = sphi 0, %s66
      %s67 = sphi 0, %s64
      %s68 = sphi 0, %s67
      %s84 = sphi 0, %s68
      %s92 = sphi 0, %s94
      %s95 = sphi 0, %s92
      %s96 = sphi 0, %s95
      %s112 = sphi 0, %s96
    $region4: #{tpu_custom_call.1} parent=1 // loop_header_branch
      %17 = sbr.rel (%p15) target = $region8
    $region5: #{tpu_custom_call.1} parent=1 // loop_body
      %s19 = ssub.s32 %s14, 1
      %s20 = ssub.s32 %s14, 2
      %s27 = sadd.s32 1, %s22
      %p28 = scmp.ge.s32.totalorder %s27, 2
      %s29 = scalar_select %p28, 0, %s27
      %s30 = sadd.s32 1, %s21
      %s31 = scalar_select %p28, %s30, %s21
      %p32 = scmp.ge.s32.totalorder %s31, 1
      %s33 = scalar_select %p32, 0, %s31
      %s34 = ssub.s32 %s22, %s29
      %s35 = ssub.s32 %s21, %s33
      %s36 = sor.u32 %s34, %s35
      %p37 = scmp.eq.s32.totalorder %s36, 0
      %s39 = sadd.s32 %s38, 1
      %s40 = scalar_select %p37, %s38, %s39
      %p43 = pneg %p37
      %p44 = scmp.eq.s32.totalorder %s14, 1
      %p45 = por %p43, %p44
      %p46 = scmp.ne.s32.totalorder %s38, %s41
      %p47 = scmp.eq.s32.totalorder %s14, 0
      %p48 = por %p46, %p47
      %p49 = scmp.ne.s32.totalorder %s38, %s41
      %p50 = scmp.eq.s32.totalorder %s19, 1
      %p51 = por %p49, %p50
      %p52 = scmp.ne.s32.totalorder %s41, %s42
      %p53 = scmp.eq.s32.totalorder %s19, 0
      %p54 = por %p52, %p53
      %p55 = scmp.ne.s32.totalorder %s41, %s42
      %p56 = scmp.eq.s32.totalorder %s20, 1
      %p57 = por %p55, %p56
      %p59 = scmp.ne.s32.totalorder %s42, %s58
      %p60 = scmp.eq.s32.totalorder %s20, 0
      %p61 = por %p59, %p60
      %s62 = ssub.s32 %s21, %s33
      %p63 = scmp.eq.s32.totalorder %s62, 0
      %s65 = sadd.s32 %s64, 1
      %s66 = scalar_select %p63, %s64, %s65
      %p69 = pneg %p63
      %p70 = scmp.eq.s32.totalorder %s14, 1
      %p71 = por %p69, %p70
      %p72 = scmp.ne.s32.totalorder %s64, %s67
      %p73 = scmp.eq.s32.totalorder %s14, 0
      %p74 = por %p72, %p73
      %p75 = scmp.ne.s32.totalorder %s64, %s67
      %p76 = scmp.eq.s32.totalorder %s19, 1
      %p77 = por %p75, %p76
      %p78 = scmp.ne.s32.totalorder %s67, %s68
      %p79 = scmp.eq.s32.totalorder %s19, 0
      %p80 = por %p78, %p79
      %p81 = scmp.ne.s32.totalorder %s67, %s68
      %p82 = scmp.eq.s32.totalorder %s20, 1
      %p83 = por %p81, %p82
      %p85 = scmp.ne.s32.totalorder %s68, %s84
      %p86 = scmp.eq.s32.totalorder %s20, 0
      %p87 = por %p85, %p86
      %s88 = ssub.s32 %s22, %s29
      %s89 = ssub.s32 %s21, %s33
      %s90 = sor.u32 %s88, %s89
      %p91 = scmp.eq.s32.totalorder %s90, 0
      %s93 = sadd.s32 %s92, 1
      %s94 = scalar_select %p91, %s92, %s93
      %p97 = pneg %p91
      %p98 = scmp.eq.s32.totalorder %s14, 1
      %p99 = por %p97, %p98
      %p100 = scmp.ne.s32.totalorder %s92, %s95
      %p101 = scmp.eq.s32.totalorder %s14, 0
      %p102 = por %p100, %p101
      %p103 = scmp.ne.s32.totalorder %s92, %s95
      %p104 = scmp.eq.s32.totalorder %s19, 1
      %p105 = por %p103, %p104
      %p106 = scmp.ne.s32.totalorder %s95, %s96
      %p107 = scmp.eq.s32.totalorder %s19, 0
      %p108 = por %p106, %p107
      %p109 = scmp.ne.s32.totalorder %s95, %s96
      %p110 = scmp.eq.s32.totalorder %s20, 1
      %p111 = por %p109, %p110
      %p113 = scmp.ne.s32.totalorder %s96, %s112
      %p114 = scmp.eq.s32.totalorder %s20, 0
      %p115 = por %p113, %p114
      %p116 = scmp.le.s32.totalorder 1, %s14
      %p117 = scmp.lt.s32.totalorder %s14, 3
      %p118 = pnand %p116, %p117
      %p119 = pneg %p118
      // Predicated region
      $region9: #{tpu_custom_call.1} parent=5 // pred_check
        _
      $region10: #{tpu_custom_call.1} parent=5 // pred_check_branch
        %121 = sbr.rel (%p118) target = $region12
      $region11: #{tpu_custom_call.1} parent=5 // pred_region
        %s122 = ssub.s32 %s14, 1
        // Predicated region
        $region13: #{tpu_custom_call.1} parent=11 // pred_check
          %p123 = pneg %p80
        $region14: #{tpu_custom_call.1} parent=11 // pred_check_branch
          %125 = sbr.rel (%p123) target = $region16
        $region15: #{tpu_custom_call.1} parent=11 // pred_region
          %p126 = scmp.lt.s32.totalorder %s23, 0
          %s127 = scalar_select %p126, %s23, 0
          %s128 = smul.addr %s127, 2
          %s129 = scalar_lea.vmem %s1, %s128
        $region16: #{tpu_custom_call.1} parent=11 // pred_fallthru
          _
      $region12: #{tpu_custom_call.1} parent=5 // pred_fallthru
        _
      %p130 = scmp.lt.s32.totalorder %s14, 2
      // Predicated region
      $region17: #{tpu_custom_call.1} parent=5 // pred_check
        %p131 = pneg %p130
      $region18: #{tpu_custom_call.1} parent=5 // pred_check_branch
        %133 = sbr.rel (%p131) target = $region20
      $region19: #{tpu_custom_call.1} parent=5 // pred_region
        // Predicated region
        $region21: #{tpu_custom_call.1} parent=19 // pred_check
          %p134 = pneg %p48
        $region22: #{tpu_custom_call.1} parent=19 // pred_check_branch
          %136 = sbr.rel (%p134) target = $region24
        $region23: #{tpu_custom_call.1} parent=19 // pred_region
          %s137 = sand.u32 %s38, 1
          %s138 = scalar_lea.sflag [#allocation3], %s137
          %s139 = sand.u32 %s38, 1
          %s140 = smul.addr %s139, 2
          %s141 = scalar_lea.vmem [#allocation2], %s140
          %s143 = ssub.s32 32, 32
          %144 = vsyncadd %s138, %s143
          %s145 = sadd.s32 %s21, %s22
          %s146 = smul.addr %s145, 32
          %s147 = scalar_lea.hbm %s0, %s146
          %s149 = sshll.u32 %s141, 4
          %s150 = int_to_ptr.vmem [resolvable:$true] %s149
          %152 = dma.hbm_to_vmem [thread:$0]  %s147, 32, %s150, %s138
        $region24: #{tpu_custom_call.1} parent=19 // pred_fallthru
          _
      $region20: #{tpu_custom_call.1} parent=5 // pred_fallthru
        _
      %p153 = scmp.le.s32.totalorder 1, %s14
      %p154 = scmp.lt.s32.totalorder %s14, 3
      %p155 = pnand %p153, %p154
      %p156 = pneg %p155
      // Predicated region
      $region25: #{tpu_custom_call.1} parent=5 // pred_check
        _
      $region26: #{tpu_custom_call.1} parent=5 // pred_check_branch
        %158 = sbr.rel (%p155) target = $region28
      $region27: #{tpu_custom_call.1} parent=5 // pred_region
        %s159 = ssub.s32 %s14, 1
        %s160 = sand.u32 %s41, 1
        %s161 = scalar_lea.sflag [#allocation3], %s160
        %s162 = sand.u32 %s41, 1
        %s163 = smul.addr %s162, 2
        %s164 = scalar_lea.vmem [#allocation2], %s163
        // Predicated region
        $region29: #{tpu_custom_call.1} parent=27 // pred_check
          %p165 = pneg %p54
        $region30: #{tpu_custom_call.1} parent=27 // pred_check_branch
          %167 = sbr.rel (%p165) target = $region32
        $region31: #{tpu_custom_call.1} parent=27 // pred_region
          %168 = dma.done %s161, 32
        $region32: #{tpu_custom_call.1} parent=27 // pred_fallthru
          _
        %s169 = sand.u32 %s41, 1
        %s170 = scalar_lea.sflag [#allocation3], %s169
        %s171 = sand.u32 %s41, 1
        %s172 = smul.addr %s171, 2
        %s173 = scalar_lea.vmem [#allocation2], %s172
        %p174 = pneg %p54
        %p175 = pneg %p51
        %p176 = scmp.lt.s32.totalorder %s23, 0
        %s177 = scalar_select %p176, %s23, 0
        %s178 = smul.addr %s177, 2
        %s179 = scalar_lea.vmem %s1, %s178
        %p180 = pneg %p80
        %p181 = pneg %p77
        %p182 = pneg %p108
        %p183 = pneg %p105
        %s184 = sand.u32 %s95, 1
        %s185 = scalar_lea.sflag [#allocation4], %s184
        %s186 = sand.u32 %s95, 1
        %s187 = smul.addr %s186, 2
        %s188 = scalar_lea.vmem [#allocation5], %s187
        %p189 = scmp.lt.s32.totalorder %s23, 0
        %s190 = scalar_select %p189, %s23, 0
        %s191 = smul.addr %s190, 2
        %s192 = scalar_lea.vmem %s1, %s191
        %v193 = vld [vmem:[%s164] sm:$0x3]
        %v194 = vld [vmem:[%s192] sm:$0x3]
        %v195 = vadd.f32 %v193, %v194
        %196 = vst [vmem:[%s188] sm:$0x3] %v195
        %s197 = sand.u32 %s95, 1
        %s198 = scalar_lea.sflag [#allocation4], %s197
        %s199 = sand.u32 %s95, 1
        %s200 = smul.addr %s199, 2
        %s201 = scalar_lea.vmem [#allocation5], %s200
        // Predicated region
        $region33: #{tpu_custom_call.1} parent=27 // pred_check
          %p202 = pneg %p105
        $region34: #{tpu_custom_call.1} parent=27 // pred_check_branch
          %204 = sbr.rel (%p202) target = $region36
        $region35: #{tpu_custom_call.1} parent=27 // pred_region
          %s206 = ssub.s32 32, 32
          %207 = vsyncadd %s198, %s206
          %s208 = sadd.s32 %s23, %s24
          %s209 = smul.addr %s208, 32
          %s210 = scalar_lea.hbm %s2, %s209
          %s212 = sshll.u32 %s201, 4
          %s213 = int_to_ptr.vmem [resolvable:$true] %s212
          %215 = dma.vmem_to_hbm [thread:$0]  %s213, 32, %s210, %s198
        $region36: #{tpu_custom_call.1} parent=27 // pred_fallthru
          _
      $region28: #{tpu_custom_call.1} parent=5 // pred_fallthru
        _
      %p216 = scmp.le.s32.totalorder 2, %s14
      // Predicated region
      $region37: #{tpu_custom_call.1} parent=5 // pred_check
        %p217 = pneg %p216
      $region38: #{tpu_custom_call.1} parent=5 // pred_check_branch
        %219 = sbr.rel (%p217) target = $region40
      $region39: #{tpu_custom_call.1} parent=5 // pred_region
        %s220 = ssub.s32 %s14, 2
        // Predicated region
        $region41: #{tpu_custom_call.1} parent=39 // pred_check
          %p221 = pneg %p111
        $region42: #{tpu_custom_call.1} parent=39 // pred_check_branch
          %223 = sbr.rel (%p221) target = $region44
        $region43: #{tpu_custom_call.1} parent=39 // pred_region
          %s224 = sand.u32 %s96, 1
          %s225 = scalar_lea.sflag [#allocation4], %s224
          %s226 = sand.u32 %s96, 1
          %s227 = smul.addr %s226, 2
          %s228 = scalar_lea.vmem [#allocation5], %s227
          %229 = dma.done %s225, 32
        $region44: #{tpu_custom_call.1} parent=39 // pred_fallthru
          _
      $region40: #{tpu_custom_call.1} parent=5 // pred_fallthru
        _
    $region6: #{tpu_custom_call.1} parent=1 // loop_footer
      %s18 = sadd.s32 1, %s14
    $region7: #{tpu_custom_call.1} parent=1 // loop_footer_branch
      %13 = sbr.rel target = $region3
    $region8: #{tpu_custom_call.1} parent=1 // loop_exit
      _
    %230 = vsyncpa [#allocation3], 1
    %s231 = scalar_lea.sflag [#allocation3], 1
    %232 = vsyncpa %s231, 1
    %233 = vsyncpa [#allocation4], 1
    %s234 = scalar_lea.sflag [#allocation4], 1
    %235 = vsyncpa %s234, 1

</llo_original>
